<compile_context>
chip_gen: v7x
topology: tpu7x:2x2x1
jax: 0.10.0
libtpu: 0.0.40
codegen_flags: <defaults>
</compile_context>

<pallas_src>
import math
import numpy as np
import jax
import jax.numpy as jnp
from jax import lax
from jax.experimental import pallas as pl
from jax.experimental.pallas import tpu as pltpu

# ----- module hyper-parameters (match nn.Module defaults) -----
IN_FEATURES = 32
OUT_FEATURES = 4
PROXY_PER_CLASS = 10
SCALING = 1.0
GAMMA = 1.0
NORM_EPS = 1e-12  # F.normalize eps

# The group softmax below skips max-subtraction; it is safe because
# sim in [-4*SCALING^2, 0] and exp(GAMMA * sim) cannot underflow at these hyper-params.
assert 4.0 * SCALING * SCALING * GAMMA < 80.0, (
    "raise-proof guard: re-enable per-class max subtraction if scaling/gamma grow")


def _multi_cosine_kernel(f_ref, wn_ref, wsq_ref, member_ref, o_ref):
    f = f_ref[...].astype(jnp.float32)        # [TB, D]
    wn = wn_ref[...]                          # [P, D]  pre-normalized weights (f32)
    w_sq = wsq_ref[...]                       # [1, P]  exact ||wn_j||^2
    member = member_ref[...]                  # [P, C]  one-hot proxy -> class

    tb = f.shape[0]

    # --- SCALING * F.normalize(x, p=2, dim=-1) via rsqrt (EUP) ---
    sum_sq = jnp.sum(f * f, axis=-1, keepdims=True)                      # [TB, 1]
    inv = lax.rsqrt(jnp.maximum(sum_sq, NORM_EPS * NORM_EPS))            # 1/max(||f||, eps)
    fn = (SCALING * inv) * f                                             # [TB, D]
    # exact ||fn||^2 without re-squaring / lane-reducing fn (covers sub-eps rows)
    f_sq = (SCALING * SCALING) * sum_sq * (inv * inv)                    # [TB, 1]

    # --- stable_cosine_distance: ||fn||^2 + ||wn||^2 - 2 fn.wn, clamped at 0 ---
    dots = lax.dot_general(fn, wn, (((1,), (1,)), ((), ())),
                           preferred_element_type=jnp.float32)           # [TB, P]
    d2 = jnp.maximum(f_sq + w_sq - 2.0 * dots, 0.0)
    sim = -d2                                                            # [TB, P]

    # --- _reduce_proxies (merging='softmax'): one fused MXU push for numer & denom ---
    e = jnp.exp(GAMMA * sim)                                             # [TB, P]
    stacked = jnp.concatenate([e, sim * e], axis=0)                      # [2*TB, P]
    red = lax.dot_general(stacked, member, (((1,), (0,)), ((), ())),
                          preferred_element_type=jnp.float32)            # [2*TB, C]
    denom = red[:tb]
    numer = red[tb:]
    o_ref[...] = (numer / denom).astype(o_ref.dtype)


def multi_cosine_linear(features, weights):
    B, D = features.shape
    P = weights.shape[0]
    assert P % PROXY_PER_CLASS == 0
    C = P // PROXY_PER_CLASS

    # --- hoisted weight normalization (parameters, not activations) ---
    w = weights.astype(jnp.float32)
    w_sum_sq = jnp.sum(w * w, axis=-1, keepdims=True)                    # [P, 1]
    w_inv = lax.rsqrt(jnp.maximum(w_sum_sq, NORM_EPS * NORM_EPS))
    wn = (SCALING * w_inv) * w                                           # [P, D]
    w_sq = ((SCALING * SCALING) * w_sum_sq * (w_inv * w_inv)).reshape(1, P)  # [1, P]

    # one-hot proxy -> class membership, built once (no in-kernel iotas)
    member = jnp.asarray(
        (np.arange(P)[:, None] // PROXY_PER_CLASS == np.arange(C)[None, :]
         ).astype(np.float32))                                           # [P, C]

    # batch tile: whole batch for small B, 512-row tiles (pipelined) otherwise.
    # Working set per step stays well under the 32 MiB scoped VMEM default on v7x.
    TB = B if B <= 512 else 512
    grid = (pl.cdiv(B, TB),)

    return pl.pallas_call(
        _multi_cosine_kernel,
        out_shape=jax.ShapeDtypeStruct((B, C), jnp.float32),
        grid=grid,
        in_specs=[
            pl.BlockSpec((TB, D), lambda i: (i, 0)),   # features: tiled over batch
            pl.BlockSpec((P, D), lambda i: (0, 0)),    # wn: resident
            pl.BlockSpec((1, P), lambda i: (0, 0)),    # ||wn||^2: resident
            pl.BlockSpec((P, C), lambda i: (0, 0)),    # member: resident
        ],
        out_specs=pl.BlockSpec((TB, C), lambda i: (i, 0)),
        compiler_params=pltpu.CompilerParams(
            dimension_semantics=("parallel",)),        # megacore split on v7x
    )(features, wn, w_sq, member)


def _reference_forward(x, w):
    """Pure-JAX reference mirroring the PyTorch forward."""
    fn = SCALING * x / jnp.maximum(jnp.linalg.norm(x, axis=-1, keepdims=True), NORM_EPS)
    wn = SCALING * w / jnp.maximum(jnp.linalg.norm(w, axis=-1, keepdims=True), NORM_EPS)
    d2 = (jnp.sum(fn * fn, -1, keepdims=True) + jnp.sum(wn * wn, -1)[None, :]
          - 2.0 * fn @ wn.T)
    sim = -jnp.maximum(d2, 0.0)
    B, P = sim.shape
    s = sim.reshape(B, P // PROXY_PER_CLASS, PROXY_PER_CLASS)
    att = jax.nn.softmax(GAMMA * s, axis=-1)
    return (s * att).sum(-1)


if __name__ == "__main__":
    key = jax.random.PRNGKey(0)
    kx, kw = jax.random.split(key)

    B = 8
    x = jax.random.normal(kx, (B, IN_FEATURES), dtype=jnp.float32)

    # reset_parameters(): uniform(-stdv, stdv), stdv = 1/sqrt(in_features)
    # (init_parameters_kmeans is a no-op since features=None)
    stdv = 1.0 / math.sqrt(IN_FEATURES)
    weights = jax.random.uniform(
        kw, (OUT_FEATURES * PROXY_PER_CLASS, IN_FEATURES),
        minval=-stdv, maxval=stdv, dtype=jnp.float32)

    out = multi_cosine_linear(x, weights)
    out = jax.block_until_ready(out)

    ref = _reference_forward(x, weights)
    assert out.shape == (B, OUT_FEATURES)
    assert jnp.allclose(out, ref, atol=1e-5, rtol=1e-5), (out, ref)

    print("KERNEL_OK")
</pallas_src>

<mosaic_0001>
module attributes {stable_mosaic.version = 11 : i64} {
  func.func @_multi_cosine_kernel(%arg0: i32, %arg1: memref<8x32xf32, #tpu.memory_space<vmem>>, %arg2: memref<40x32xf32, #tpu.memory_space<vmem>>, %arg3: memref<1x40xf32, #tpu.memory_space<vmem>>, %arg4: memref<40x4xf32, #tpu.memory_space<vmem>>, %arg5: memref<8x4xf32, #tpu.memory_space<vmem>>) attributes {dimension_semantics = [#tpu.dimension_semantics<parallel>], iteration_bounds = array<i64: 1>, scalar_prefetch = 0 : i64, scratch_operands = 0 : i64, tpu.core_type = #tpu.core_type<tc>, window_params = [{transform_indices = @transform_0, window_bounds = array<i64: 8, 32>}, {pipeline_mode = #tpu.pipeline_mode<synchronous>, transform_indices = @transform_1, window_bounds = array<i64: 40, 32>}, {pipeline_mode = #tpu.pipeline_mode<synchronous>, transform_indices = @transform_2, window_bounds = array<i64: 1, 40>}, {pipeline_mode = #tpu.pipeline_mode<synchronous>, transform_indices = @transform_3, window_bounds = array<i64: 40, 4>}, {transform_indices = @transform_4, window_bounds = array<i64: 8, 4>}]} {
    %c0 = arith.constant 0 : index
    %c0_0 = arith.constant 0 : index
    %0 = vector.load %arg1[%c0, %c0_0] : memref<8x32xf32, #tpu.memory_space<vmem>>, vector<8x32xf32>
    %c0_1 = arith.constant 0 : index
    %c0_2 = arith.constant 0 : index
    %1 = vector.load %arg2[%c0_1, %c0_2] : memref<40x32xf32, #tpu.memory_space<vmem>>, vector<40x32xf32>
    %c0_3 = arith.constant 0 : index
    %c0_4 = arith.constant 0 : index
    %2 = vector.load %arg3[%c0_3, %c0_4] : memref<1x40xf32, #tpu.memory_space<vmem>>, vector<1x40xf32>
    %c0_5 = arith.constant 0 : index
    %c0_6 = arith.constant 0 : index
    %3 = vector.load %arg4[%c0_5, %c0_6] : memref<40x4xf32, #tpu.memory_space<vmem>>, vector<40x4xf32>
    %4 = arith.mulf %0, %0 : vector<8x32xf32>
    %cst = arith.constant dense<0.000000e+00> : vector<8xf32>
    %5 = vector.multi_reduction <add>, %4, %cst [1] : vector<8x32xf32> to vector<8xf32>
    %6 = vector.shape_cast %5 : vector<8xf32> to vector<8x1xf32>
    %cst_7 = arith.constant 1.000000e-24 : f32
    %7 = vector.broadcast %cst_7 : f32 to vector<8x1xf32>
    %8 = arith.maximumf %6, %7 : vector<8x1xf32>
    %9 = math.rsqrt %8 : vector<8x1xf32>
    %cst_8 = arith.constant 1.000000e+00 : f32
    %10 = vector.broadcast %cst_8 : f32 to vector<8x1xf32>
    %11 = arith.mulf %10, %9 : vector<8x1xf32>
    %12 = vector.broadcast %11 : vector<8x1xf32> to vector<8x32xf32>
    %13 = arith.mulf %12, %0 : vector<8x32xf32>
    %cst_9 = arith.constant 1.000000e+00 : f32
    %14 = vector.broadcast %cst_9 : f32 to vector<8x1xf32>
    %15 = arith.mulf %14, %6 : vector<8x1xf32>
    %16 = arith.mulf %9, %9 : vector<8x1xf32>
    %17 = arith.mulf %15, %16 : vector<8x1xf32>
    %cst_10 = arith.constant dense<0.000000e+00> : vector<8x40xf32>
    %18 = tpu.matmul %13, %1, %cst_10 {dimension_numbers = #tpu.dot_dimension_numbers<[1], [1], [0], [0], [0, 0, 1, 0], [], []>} : vector<8x32xf32>, vector<40x32xf32>, vector<8x40xf32> -> vector<8x40xf32>
    %19 = vector.broadcast %17 : vector<8x1xf32> to vector<8x40xf32>
    %20 = vector.broadcast %2 : vector<1x40xf32> to vector<8x40xf32>
    %21 = arith.addf %19, %20 : vector<8x40xf32>
    %cst_11 = arith.constant 2.000000e+00 : f32
    %22 = vector.broadcast %cst_11 : f32 to vector<8x40xf32>
    %23 = arith.mulf %22, %18 : vector<8x40xf32>
    %24 = arith.subf %21, %23 : vector<8x40xf32>
    %cst_12 = arith.constant 0.000000e+00 : f32
    %25 = vector.broadcast %cst_12 : f32 to vector<8x40xf32>
    %26 = arith.maximumf %24, %25 : vector<8x40xf32>
    %cst_13 = arith.constant 0.000000e+00 : f32
    %27 = vector.broadcast %cst_13 : f32 to vector<8x40xf32>
    %28 = arith.subf %27, %26 : vector<8x40xf32>
    %cst_14 = arith.constant 1.000000e+00 : f32
    %29 = vector.broadcast %cst_14 : f32 to vector<8x40xf32>
    %30 = arith.mulf %29, %28 : vector<8x40xf32>
    %31 = math.exp %30 : vector<8x40xf32>
    %32 = arith.mulf %28, %31 : vector<8x40xf32>
    %33 = tpu.concatenate %31, %32 in 0 : vector<8x40xf32>, vector<8x40xf32> -> vector<16x40xf32>
    %cst_15 = arith.constant dense<0.000000e+00> : vector<16x4xf32>
    %34 = tpu.matmul %33, %3, %cst_15 {dimension_numbers = #tpu.dot_dimension_numbers<[1], [0], [0], [1], [0, 0, 1, 1], [], []>} : vector<16x40xf32>, vector<40x4xf32>, vector<16x4xf32> -> vector<16x4xf32>
    %35 = vector.extract_strided_slice %34 {offsets = [0, 0], sizes = [8, 4], strides = [1, 1]} : vector<16x4xf32> to vector<8x4xf32>
    %36 = vector.extract_strided_slice %34 {offsets = [8, 0], sizes = [8, 4], strides = [1, 1]} : vector<16x4xf32> to vector<8x4xf32>
    %37 = arith.divf %36, %35 : vector<8x4xf32>
    %c0_16 = arith.constant 0 : index
    %c0_17 = arith.constant 0 : index
    %38 = vector.load %arg5[%c0_16, %c0_17] : memref<8x4xf32, #tpu.memory_space<vmem>>, vector<8x4xf32>
    tpu.vector_store %arg5[%c0_16, %c0_17], %37 {strides = array<i32>} : memref<8x4xf32, #tpu.memory_space<vmem>>, vector<8x4xf32>,
    return
  }
  func.func @transform_0(%arg0: i32) -> (i32, i32) {
    %c0_i32 = arith.constant 0 : i32
    %c0_i32_0 = arith.constant 0 : i32
    return %arg0, %c0_i32 : i32, i32
  }
  func.func @transform_1(%arg0: i32) -> (i32, i32) {
    %c0_i32 = arith.constant 0 : i32
    %c0_i32_0 = arith.constant 0 : i32
    %c0_i32_1 = arith.constant 0 : i32
    return %c0_i32, %c0_i32_0 : i32, i32
  }
  func.func @transform_2(%arg0: i32) -> (i32, i32) {
    %c0_i32 = arith.constant 0 : i32
    %c0_i32_0 = arith.constant 0 : i32
    %c0_i32_1 = arith.constant 0 : i32
    return %c0_i32, %c0_i32_0 : i32, i32
  }
  func.func @transform_3(%arg0: i32) -> (i32, i32) {
    %c0_i32 = arith.constant 0 : i32
    %c0_i32_0 = arith.constant 0 : i32
    %c0_i32_1 = arith.constant 0 : i32
    return %c0_i32, %c0_i32_0 : i32, i32
  }
  func.func @transform_4(%arg0: i32) -> (i32, i32) {
    %c0_i32 = arith.constant 0 : i32
    %c0_i32_0 = arith.constant 0 : i32
    return %arg0, %c0_i32 : i32, i32
  }
}

</mosaic_0001>

<llo_original>
// kernel: tpu_custom_call.1
$region0: #{tpu_custom_call.1}
  #allocation0 [shape = 'u32[]', space=smem, size = 0x4, offset = 0x4, fixed_abs, tag = 'smem constant byte address 0x4 - core index']
  #allocation1 [shape = 'u32[144,128]{1,0:T(1,128)}', space=vmem, size = 0x12000, scoped, tag = 'internal scratch']
  %s0 = inlined_call_operand.vmem [shape: f32[8,32], index: 0, kind: input, shape index: {}]
  %s1 = inlined_call_operand.vmem [shape: f32[40,32], index: 1, kind: input, shape index: {}]
  %s2 = inlined_call_operand.vmem [shape: f32[1,40], index: 2, kind: input, shape index: {}]
  %s3 = inlined_call_operand.vmem [shape: f32[40,4], index: 3, kind: input, shape index: {}]
  %s4 = inlined_call_operand.vmem [shape: f32[8,4], index: 4, kind: output, shape index: {}]
  %s5 = sld [smem:[#allocation0]]
  $region26: #{tpu_custom_call.1} parent=0
    _
  %s7 = ssub.s32 1, %s5
  %s8 = scalar_select 0, %s7, %s5
  // Predicated region
  $region2: #{tpu_custom_call.1} parent=0 // pred_check
    _
  $region3: #{tpu_custom_call.1} parent=0 // pred_check_branch
    %10 = sbr.rel (0) target = $region5
  $region4: #{tpu_custom_call.1} parent=0 // pred_region
    _
  $region5: #{tpu_custom_call.1} parent=0 // pred_fallthru
    _
  // Predicated region
  $region6: #{tpu_custom_call.1} parent=0 // pred_check
    _
  $region7: #{tpu_custom_call.1} parent=0 // pred_check_branch
    %12 = sbr.rel (0) target = $region9
  $region8: #{tpu_custom_call.1} parent=0 // pred_region
    _
  $region9: #{tpu_custom_call.1} parent=0 // pred_fallthru
    _
  // Predicated region
  $region10: #{tpu_custom_call.1} parent=0 // pred_check
    _
  $region11: #{tpu_custom_call.1} parent=0 // pred_check_branch
    %14 = sbr.rel (0) target = $region13
  $region12: #{tpu_custom_call.1} parent=0 // pred_region
    _
  $region13: #{tpu_custom_call.1} parent=0 // pred_fallthru
    _
  // Predicated region
  $region14: #{tpu_custom_call.1} parent=0 // pred_check
    _
  $region15: #{tpu_custom_call.1} parent=0 // pred_check_branch
    %16 = sbr.rel (0) target = $region17
  $region16: #{tpu_custom_call.1} parent=0 // pred_region
    _
  $region17: #{tpu_custom_call.1} parent=0 // pred_fallthru
    _
  %v17 = vld [vmem:[%s0] sm:$0xff]
  %v18 = vld [vmem:[%s1] sm:$0xff]
  %v19 = vld [vmem:[%s1 + $0x8] sm:$0xff]
  %v20 = vld [vmem:[%s1 + $0x10] sm:$0xff]
  %v21 = vld [vmem:[%s1 + $0x18] sm:$0xff]
  %v22 = vld [vmem:[%s1 + $0x20] sm:$0xff]
  %v23 = vld [vmem:[%s2] sm:$0x1]
  %v24 = vld [vmem:[%s3] sm:$0xff]
  %v25 = vld [vmem:[%s3 + $0x8] sm:$0xff]
  %v26 = vld [vmem:[%s3 + $0x10] sm:$0xff]
  %v27 = vld [vmem:[%s3 + $0x18] sm:$0xff]
  %v28 = vld [vmem:[%s3 + $0x20] sm:$0xff]
  %v29 = vmul.f32 %v17, %v17
  %vm30 = vcmask 261120
  %v31 = vsel %vm30, %v29, 0.0
  %32 = vadd.xlane.f32.xlu0 %v31
  %v33 = vpop.xlane.xlu0 %32
  %v34 = vmax.f32 %v33, 1e-24
  %v35 = vrsqrt.pop %v34
  %v36 = vmul.f32 %v35, %v17
  %v37 = vmul.f32 %v35, %v35
  %v38 = vmul.f32 %v33, %v37
  %v40 = vsel %vm30, %v36, 0
  %v43 = vsel %vm30, %v18, 0
  %v46 = vsel %vm30, %v19, 0
  %v49 = vsel %vm30, %v20, 0
  %v52 = vsel %vm30, %v21, 0
  %v55 = vsel %vm30, %v22, 0
  %57 = vmatprep.subr.mxu0 0.0
  %58 = vmatpush1.xpose.msra.mxu0 %v43
  %59 = vmatprep.subr.mxu0 0.0
  %60 = vmatpush1.xpose.msra.mxu0 %v46
  %61 = vmatprep.subr.mxu0 0.0
  %62 = vmatpush1.xpose.msra.mxu0 %v49
  %63 = vmatprep.subr.mxu0 0.0
  %64 = vmatpush1.xpose.msra.mxu0 %v52
  %65 = vmatprep.subr.mxu0 0.0
  %66 = vmatpush1.xpose.msra.mxu0 %v55
  %67 = vmatprep.subr.mxu0 0.0
  %68 = vmatpush1.xpose.msra.mxu0 0.0
  %69 = vmatprep.subr.mxu0 0.0
  %70 = vmatpush1.xpose.msra.mxu0 0.0
  %71 = vmatprep.subr.mxu0 0.0
  %72 = vmatpush1.xpose.msra.mxu0 0.0
  %73 = vmatprep.subr.mxu0 0.0
  %74 = vmatpush1.xpose.msra.mxu0 0.0
  %75 = vmatprep.subr.mxu0 0.0
  %76 = vmatpush1.xpose.msra.mxu0 0.0
  %77 = vmatprep.subr.mxu0 0.0
  %78 = vmatpush1.xpose.msra.mxu0 0.0
  %79 = vmatprep.subr.mxu0 0.0
  %80 = vmatpush1.xpose.msra.mxu0 0.0
  %81 = vmatprep.subr.mxu0 0.0
  %82 = vmatpush1.xpose.msra.mxu0 0.0
  %83 = vmatprep.subr.mxu0 0.0
  %84 = vmatpush1.xpose.msra.mxu0 0.0
  %85 = vmatprep.subr.mxu0 0.0
  %86 = vmatpush1.xpose.msra.mxu0 0.0
  %87 = vmatprep.subr.mxu0 0.0
  %88 = vmatpush1.xpose.msra.mxu0 0.0
  %89 = vmatprep.subr.mxu0 0.0
  %90 = vmatpush1.xpose.msra.mxu0 0.0
  %91 = vmatprep.subr.mxu0 0.0
  %92 = vmatpush1.xpose.msra.mxu0 0.0
  %93 = vmatprep.subr.mxu0 0.0
  %94 = vmatpush1.xpose.msra.mxu0 0.0
  %95 = vmatprep.subr.mxu0 0.0
  %96 = vmatpush1.xpose.msra.mxu0 0.0
  %97 = vmatprep.subr.mxu0 0.0
  %98 = vmatpush1.xpose.msra.mxu0 0.0
  %99 = vmatprep.subr.mxu0 0.0
  %100 = vmatpush1.xpose.msra.mxu0 0.0
  %101 = vmatprep.subr.mxu0 0.0
  %102 = vmatpush1.xpose.msra.mxu0 0.0
  %103 = vmatprep.subr.mxu0 0.0
  %104 = vmatpush1.xpose.msra.mxu0 0.0
  %105 = vmatprep.subr.mxu0 0.0
  %106 = vmatpush1.xpose.msra.mxu0 0.0
  %107 = vmatprep.subr.mxu0 0.0
  %108 = vmatpush1.xpose.msra.mxu0 0.0
  %109 = vmatprep.subr.mxu0 0.0
  %110 = vmatpush1.xpose.msra.mxu0 0.0
  %111 = vmatprep.subr.mxu0 0.0
  %112 = vmatpush1.xpose.msra.mxu0 0.0
  %113 = vmatprep.subr.mxu0 0.0
  %114 = vmatpush1.xpose.msra.mxu0 0.0
  %115 = vmatprep.subr.mxu0 0.0
  %116 = vmatpush1.xpose.msra.mxu0 0.0
  %117 = vmatprep.subr.mxu0 0.0
  %118 = vmatpush1.xpose.msra.mxu0 0.0
  %119 = vmatprep.subr.mxu0 0.0
  %120 = vmatpush1.xpose.msra.mxu0 0.0
  %121 = vmatprep.mubr.f32.mxu0 0.0
  %122 = vmatmul.mubr.f32.gmra.mrb[0].mxu0 %v40
  %v123 = vpop.f32.mrb[0].mxu0
  %v124 = vadd.f32 0.0, %v123
  %v125 = vpop.f32.mrb[0].mxu0
  %126 = vdwg.mxu0
  %v128 = vlaneseq
  %v129 = vshrl.u32 %v128, 7
  %v130 = vsub.s32 0, %v129
  %v131 = vrot.slane %v23, %v130
  %v133 = vadd.f32 %v38, %v131
  %v134 = vmul.f32 %v124, 2.0
  %v135 = vsub.f32 %v133, %v134
  %v136 = vmax.f32 %v135, 0.0
  %v137 = vsub.f32 0.0, %v136
  %v138 = vmul.f32 %v137, 1.442695
  %v139 = vpow.pop %v138
  %v140 = vmul.f32 %v137, %v139
  %vm141 = vcmask 326656
  %v143 = vsel %vm141, %v139, 0
  %v146 = vsel %vm141, %v140, 0
  %148 = vmatprep.subr.mxu0 0.0
  %149 = vmatpush1.msra.mxu0 %v24
  %150 = vmatprep.subr.mxu0 0.0
  %151 = vmatpush1.msra.mxu0 %v25
  %152 = vmatprep.subr.mxu0 0.0
  %153 = vmatpush1.msra.mxu0 %v26
  %154 = vmatprep.subr.mxu0 0.0
  %155 = vmatpush1.msra.mxu0 %v27
  %156 = vmatprep.subr.mxu0 0.0
  %157 = vmatpush1.msra.mxu0 %v28
  %158 = vmatprep.subr.mxu0 0.0
  %159 = vmatpush1.msra.mxu0 0.0
  %160 = vmatprep.subr.mxu0 0.0
  %161 = vmatpush1.msra.mxu0 0.0
  %162 = vmatprep.subr.mxu0 0.0
  %163 = vmatpush1.msra.mxu0 0.0
  %164 = vmatprep.subr.mxu0 0.0
  %165 = vmatpush1.msra.mxu0 0.0
  %166 = vmatprep.subr.mxu0 0.0
  %167 = vmatpush1.msra.mxu0 0.0
  %168 = vmatprep.subr.mxu0 0.0
  %169 = vmatpush1.msra.mxu0 0.0
  %170 = vmatprep.subr.mxu0 0.0
  %171 = vmatpush1.msra.mxu0 0.0
  %172 = vmatprep.subr.mxu0 0.0
  %173 = vmatpush1.msra.mxu0 0.0
  %174 = vmatprep.subr.mxu0 0.0
  %175 = vmatpush1.msra.mxu0 0.0
  %176 = vmatprep.subr.mxu0 0.0
  %177 = vmatpush1.msra.mxu0 0.0
  %178 = vmatprep.subr.mxu0 0.0
  %179 = vmatpush1.msra.mxu0 0.0
  %180 = vmatprep.subr.mxu0 0.0
  %181 = vmatpush1.msra.mxu0 0.0
  %182 = vmatprep.subr.mxu0 0.0
  %183 = vmatpush1.msra.mxu0 0.0
  %184 = vmatprep.subr.mxu0 0.0
  %185 = vmatpush1.msra.mxu0 0.0
  %186 = vmatprep.subr.mxu0 0.0
  %187 = vmatpush1.msra.mxu0 0.0
  %188 = vmatprep.subr.mxu0 0.0
  %189 = vmatpush1.msra.mxu0 0.0
  %190 = vmatprep.subr.mxu0 0.0
  %191 = vmatpush1.msra.mxu0 0.0
  %192 = vmatprep.subr.mxu0 0.0
  %193 = vmatpush1.msra.mxu0 0.0
  %194 = vmatprep.subr.mxu0 0.0
  %195 = vmatpush1.msra.mxu0 0.0
  %196 = vmatprep.subr.mxu0 0.0
  %197 = vmatpush1.msra.mxu0 0.0
  %198 = vmatprep.subr.mxu0 0.0
  %199 = vmatpush1.msra.mxu0 0.0
  %200 = vmatprep.subr.mxu0 0.0
  %201 = vmatpush1.msra.mxu0 0.0
  %202 = vmatprep.subr.mxu0 0.0
  %203 = vmatpush1.msra.mxu0 0.0
  %204 = vmatprep.subr.mxu0 0.0
  %205 = vmatpush1.msra.mxu0 0.0
  %206 = vmatprep.subr.mxu0 0.0
  %207 = vmatpush1.msra.mxu0 0.0
  %208 = vmatprep.subr.mxu0 0.0
  %209 = vmatpush1.msra.mxu0 0.0
  %210 = vmatprep.subr.mxu0 0.0
  %211 = vmatpush1.msra.mxu0 0.0
  %212 = vmatprep.mubr.f32.mxu0 0.0
  %213 = vmatmul.mubr.f32.gmra.mrb[0].mxu0 %v143
  %v214 = vpop.f32.mrb[0].mxu0
  %v215 = vadd.f32 0.0, %v214
  %v216 = vpop.f32.mrb[0].mxu0
  %217 = vmatprep.mubr.f32.mxu0 0.0
  %218 = vmatmul.mubr.f32.gmra.mrb[0].mxu0 %v146
  %v219 = vpop.f32.mrb[0].mxu0
  %v220 = vadd.f32 0.0, %v219
  %v221 = vpop.f32.mrb[0].mxu0
  %222 = vdwg.mxu0
  %v223 = vrcp.pop %v215
  %v224 = vmul.f32 %v220, %v223
  %vm225 = vcmask 31744
  %226 = vst.msk [vmem:[%s4] sm:$0xff] %vm225, %v224
  // Predicated region
  $region18: #{tpu_custom_call.1} parent=0 // pred_check
    _
  $region19: #{tpu_custom_call.1} parent=0 // pred_check_branch
    %228 = sbr.rel (0) target = $region21
  $region20: #{tpu_custom_call.1} parent=0 // pred_region
    _
  $region21: #{tpu_custom_call.1} parent=0 // pred_fallthru
    _
  // Predicated region
  $region22: #{tpu_custom_call.1} parent=0 // pred_check
    _
  $region23: #{tpu_custom_call.1} parent=0 // pred_check_branch
    %230 = sbr.rel (0) target = $region25
  $region24: #{tpu_custom_call.1} parent=0 // pred_region
    _
  $region25: #{tpu_custom_call.1} parent=0 // pred_fallthru
    _

</llo_original>
